<compile_context>
chip_gen: v7x
topology: tpu7x:2x2x1
jax: 0.10.0
libtpu: 0.0.40
codegen_flags: <defaults>
</compile_context>

<pallas_src>
import numpy as np
import jax
import jax.numpy as jnp
from jax import lax
from jax.experimental import pallas as pl
from jax.experimental.pallas import tpu as pltpu

VMEM_LIMIT = 32 * 1024 * 1024  # safe scoped-VMEM budget on v5e / v6e / v7x


def _pick_tile(dim, cap):
    """Largest usable tile <= cap that evenly divides dim (fallback: full dim)."""
    if dim <= cap:
        return dim
    if dim % cap == 0:
        return cap
    return dim


# --------------------- tiled matmul + bias (projection / FC head) ---------------------

def matmul_bias_kernel(x_ref, w_ref, b_ref, o_ref, acc_ref):
    """(tm, tk) @ (tk, tn) accumulated over the K grid axis, bias added at the end."""
    @pl.when(pl.program_id(2) == 0)
    def _():
        acc_ref[...] = jnp.zeros_like(acc_ref)

    # bf16 operands on the MXU, f32 accumulation.
    acc_ref[...] += jnp.dot(x_ref[...].astype(jnp.bfloat16), w_ref[...],
                            preferred_element_type=jnp.float32)

    @pl.when(pl.program_id(2) == pl.num_programs(2) - 1)
    def _():
        o_ref[...] = (acc_ref[...] + b_ref[...]).astype(o_ref.dtype)


def matmul_bias(x, w_bf16, b, *, tm_cap=256, tn_cap=512, tk_cap=512):
    """x: (N, K) f32, w_bf16: (K, M) bf16, b: (M,) f32 -> (N, M) f32."""
    N, K = x.shape
    K2, M = w_bf16.shape
    assert K == K2
    tm = _pick_tile(N, tm_cap)
    tn = _pick_tile(M, tn_cap)
    tk = _pick_tile(K, tk_cap)

    cost = pl.CostEstimate(
        flops=2 * N * K * M,
        transcendentals=0,
        bytes_accessed=4 * N * K + 2 * K * M + 4 * M + 4 * N * M)

    return pl.pallas_call(
        matmul_bias_kernel,
        out_shape=jax.ShapeDtypeStruct((N, M), jnp.float32),
        grid_spec=pltpu.PrefetchScalarGridSpec(
            num_scalar_prefetch=0,
            grid=(N // tm, M // tn, K // tk),
            in_specs=[
                pl.BlockSpec((tm, tk), lambda i, j, k: (i, k)),
                pl.BlockSpec((tk, tn), lambda i, j, k: (k, j)),
                pl.BlockSpec((1, tn), lambda i, j, k: (0, j)),
            ],
            out_specs=pl.BlockSpec((tm, tn), lambda i, j, k: (i, j)),
            scratch_shapes=[pltpu.VMEM((tm, tn), jnp.float32)],
        ),
        compiler_params=pltpu.CompilerParams(
            dimension_semantics=("parallel", "parallel", "arbitrary"),
            vmem_limit_bytes=VMEM_LIMIT),
        cost_estimate=cost,
    )(x, w_bf16, b.reshape(1, M).astype(jnp.float32))


# ------------------------------ recurrent LSTM kernel ------------------------------

def lstm_recur_kernel(gx_ref, whh_ref, o_ref, h_sc, c_sc):
    """Chunk of Tc timesteps per grid step.

    gx_ref:  (Tc, B, 4H) precomputed x @ W_ih + (b_ih + b_hh), f32
    whh_ref: (H, 4H)     hidden-to-hidden weight, bf16 (resident across grid)
    o_ref:   (Tc, B, H)  hidden-state outputs, f32
    h_sc, c_sc: (B, H)   recurrent state carried across grid steps (VMEM, f32)
    """
    H = h_sc.shape[-1]
    Tc = gx_ref.shape[0]

    @pl.when(pl.program_id(0) == 0)
    def _():
        h_sc[...] = jnp.zeros_like(h_sc)
        c_sc[...] = jnp.zeros_like(c_sc)

    def step(tt, carry):
        h = h_sc[...]
        # Only the small h @ W_hh matmul sits on the serial chain.
        gates = gx_ref[tt] + jnp.dot(h.astype(jnp.bfloat16), whh_ref[...],
                                     preferred_element_type=jnp.float32)
        # PyTorch gate order: [i, f, g, o].
        i_g = jax.nn.sigmoid(gates[:, 0 * H:1 * H])
        f_g = jax.nn.sigmoid(gates[:, 1 * H:2 * H])
        g_g = jnp.tanh(gates[:, 2 * H:3 * H])
        o_g = jax.nn.sigmoid(gates[:, 3 * H:4 * H])
        c_new = f_g * c_sc[...] + i_g * g_g
        h_new = o_g * jnp.tanh(c_new)
        c_sc[...] = c_new
        h_sc[...] = h_new
        o_ref[tt] = h_new
        return carry

    # Unrolled inner loop: amortizes grid-step overhead and lets the scheduler
    # overlap MXU / EUP / VPU work across timesteps.
    lax.fori_loop(0, Tc, step, 0, unroll=True)


def lstm_layer(x_tbe, wih_bf16, whh_bf16, bias, *, t_chunk=32):
    """One LSTM layer. x_tbe: (T, B, E) f32, weights pre-transposed (E|H, 4H) bf16."""
    T, B, E = x_tbe.shape
    H = whh_bf16.shape[0]

    # Hoisted input projection: one large, well-shaped MXU matmul over all T*B rows.
    gx = matmul_bias(x_tbe.reshape(T * B, E), wih_bf16, bias)      # (T*B, 4H) f32
    gx = gx.reshape(T, B, 4 * H)

    Tc = _pick_tile(T, t_chunk)

    cost = pl.CostEstimate(
        flops=2 * T * B * H * 4 * H + 10 * T * B * H,
        transcendentals=5 * T * B * H,
        bytes_accessed=4 * T * B * 4 * H + 2 * H * 4 * H + 4 * T * B * H)

    return pl.pallas_call(
        lstm_recur_kernel,
        out_shape=jax.ShapeDtypeStruct((T, B, H), jnp.float32),
        grid_spec=pltpu.PrefetchScalarGridSpec(
            num_scalar_prefetch=0,
            grid=(T // Tc,),
            in_specs=[
                pl.BlockSpec((Tc, B, 4 * H), lambda t: (t, 0, 0)),
                # Constant index_map -> weight stays resident in VMEM.
                pl.BlockSpec((H, 4 * H), lambda t: (0, 0)),
            ],
            out_specs=pl.BlockSpec((Tc, B, H), lambda t: (t, 0, 0)),
            scratch_shapes=[
                pltpu.VMEM((B, H), jnp.float32),  # h carry
                pltpu.VMEM((B, H), jnp.float32),  # c carry
            ],
        ),
        compiler_params=pltpu.CompilerParams(
            # NOTE: the time axis MUST stay "arbitrary" (sequential); the h/c
            # scratch carry breaks if it is ever marked "parallel".
            dimension_semantics=("arbitrary",),
            vmem_limit_bytes=VMEM_LIMIT),
        cost_estimate=cost,
    )(gx, whh_bf16)


# ---------------------------------- full forward ----------------------------------

def auto_lstm_forward(inp, params, n_layer):
    # Gather embeddings directly in time-major order by transposing the tiny
    # int32 index array (no (T, B, E) activation transpose / HBM round trip).
    x = jnp.take(params["wte"], inp.T, axis=0)                      # (T, B, E) f32
    for l in range(n_layer):
        x = lstm_layer(x, params[f"wih{l}"], params[f"whh{l}"], params[f"b{l}"])
    T, B, H = x.shape
    logits = matmul_bias(x.reshape(T * B, H), params["fc_w_t"], params["fc_b"])
    # Time-major (T*B, V) -> (B, T, V). For a production vocab this transpose
    # would be folded into the FC out_spec (or the loss kept time-major).
    return jnp.transpose(logits.reshape(T, B, -1), (1, 0, 2))


# ------------------------------- pure-JAX reference --------------------------------
# Mirrors the kernel arithmetic exactly (bf16 weights/activation casts before each
# matmul, f32 accumulation and f32 gate math) so differences are only op ordering
# and transcendental implementations.

def ref_forward(inp, params, n_layer):
    x = jnp.take(params["wte"], inp.T, axis=0)                      # (T, B, E)
    T, B, E = x.shape
    for l in range(n_layer):
        wih, whh, b = params[f"wih{l}"], params[f"whh{l}"], params[f"b{l}"]
        H = whh.shape[0]
        gx = (jnp.dot(x.reshape(T * B, -1).astype(jnp.bfloat16), wih,
                      preferred_element_type=jnp.float32) + b).reshape(T, B, 4 * H)
        h = jnp.zeros((B, H), jnp.float32)
        c = jnp.zeros((B, H), jnp.float32)
        outs = []
        for t in range(T):
            gates = gx[t] + jnp.dot(h.astype(jnp.bfloat16), whh,
                                    preferred_element_type=jnp.float32)
            i_g = jax.nn.sigmoid(gates[:, :H])
            f_g = jax.nn.sigmoid(gates[:, H:2 * H])
            g_g = jnp.tanh(gates[:, 2 * H:3 * H])
            o_g = jax.nn.sigmoid(gates[:, 3 * H:])
            c = f_g * c + i_g * g_g
            h = o_g * jnp.tanh(c)
            outs.append(h)
        x = jnp.stack(outs, 0)                                      # (T, B, H)
    logits = (jnp.dot(x.reshape(T * B, -1).astype(jnp.bfloat16), params["fc_w_t"],
                      preferred_element_type=jnp.float32) + params["fc_b"])
    return jnp.transpose(logits.reshape(T, B, -1), (1, 0, 2))


# --------------------------------- deterministic init ---------------------------------

def _orthogonal(rng, shape):
    a = rng.standard_normal(shape).astype(np.float32)
    q, r = np.linalg.qr(a)
    q = q * np.sign(np.diag(r))
    return q.astype(np.float32)


def make_params(vocab_size, n_embd, n_layer):
    rng = np.random.default_rng(0)
    H = n_embd
    params = {}
    params["wte"] = jnp.asarray(
        (0.02 * rng.standard_normal((vocab_size, n_embd))).astype(np.float32))
    k = 1.0 / np.sqrt(H)
    for l in range(n_layer):
        wih = _orthogonal(rng, (4 * H, n_embd))            # PyTorch-shaped (4H, in)
        whh = _orthogonal(rng, (4 * H, H))                 # (4H, H)
        b_ih = rng.uniform(-k, k, size=(4 * H,)).astype(np.float32)
        b_hh = rng.uniform(-k, k, size=(4 * H,)).astype(np.float32)
        # Pre-transposed, bf16 for the MXU; combined bias kept in f32.
        params[f"wih{l}"] = jnp.asarray(wih.T).astype(jnp.bfloat16)   # (in, 4H)
        params[f"whh{l}"] = jnp.asarray(whh.T).astype(jnp.bfloat16)   # (H, 4H)
        params[f"b{l}"] = jnp.asarray(b_ih + b_hh)                    # (4H,) f32
    fc_w = (0.02 * rng.standard_normal((vocab_size, n_embd))).astype(np.float32)
    params["fc_w_t"] = jnp.asarray(fc_w.T).astype(jnp.bfloat16)       # (E, V)
    params["fc_b"] = jnp.zeros((vocab_size,), jnp.float32)
    return params


if __name__ == "__main__":
    # Small config consistent with AutoLstm: vocab_size, n_embd, n_layer.
    vocab_size, n_embd, n_layer = 64, 32, 2
    B, T = 2, 8

    params = make_params(vocab_size, n_embd, n_layer)

    key = jax.random.PRNGKey(0)
    inp = jax.random.randint(key, (B, T), 0, vocab_size, dtype=jnp.int32)

    logits = jax.block_until_ready(auto_lstm_forward(inp, params, n_layer))
    ref = jax.block_until_ready(ref_forward(inp, params, n_layer))

    assert logits.shape == (B, T, vocab_size)
    np.testing.assert_allclose(np.asarray(logits), np.asarray(ref),
                               rtol=2e-2, atol=2e-3)
    print("KERNEL_OK")
</pallas_src>

<mosaic_0001>
module attributes {stable_mosaic.version = 11 : i64} {
  func.func @matmul_bias_kernel(%arg0: i32, %arg1: i32, %arg2: i32, %arg3: memref<16x32xf32, #tpu.memory_space<vmem>>, %arg4: memref<32x128xbf16, #tpu.memory_space<vmem>>, %arg5: memref<1x128xf32, #tpu.memory_space<vmem>>, %arg6: memref<16x128xf32, #tpu.memory_space<vmem>>, %arg7: memref<16x128xf32, #tpu.memory_space<vmem>>) attributes {dimension_semantics = [#tpu.dimension_semantics<parallel>, #tpu.dimension_semantics<parallel>, #tpu.dimension_semantics<arbitrary>], iteration_bounds = array<i64: 1, 1, 1>, scalar_prefetch = 0 : i64, scratch_operands = 1 : i64, tpu.core_type = #tpu.core_type<tc>, window_params = [{transform_indices = @transform_0, window_bounds = array<i64: 16, 32>}, {transform_indices = @transform_1, window_bounds = array<i64: 32, 128>}, {transform_indices = @transform_2, window_bounds = array<i64: 1, 128>}, {transform_indices = @transform_3, window_bounds = array<i64: 16, 128>}]} {
    %c0_i32 = arith.constant 0 : i32
    %0 = arith.cmpi eq, %arg2, %c0_i32 : i32
    %1 = arith.extui %0 : i1 to i32
    %c0_i32_0 = arith.constant 0 : i32
    %2 = arith.cmpi ne, %1, %c0_i32_0 : i32
    scf.if %2 {
      %cst_10 = arith.constant 0.000000e+00 : f32
      %13 = vector.broadcast %cst_10 : f32 to vector<16x128xf32>
      %c0_11 = arith.constant 0 : index
      %c0_12 = arith.constant 0 : index
      %14 = vector.load %arg7[%c0_11, %c0_12] : memref<16x128xf32, #tpu.memory_space<vmem>>, vector<16x128xf32>
      tpu.vector_store %arg7[%c0_11, %c0_12], %13 {strides = array<i32>} : memref<16x128xf32, #tpu.memory_space<vmem>>, vector<16x128xf32>,
    } else {
    }
    %c0 = arith.constant 0 : index
    %c0_1 = arith.constant 0 : index
    %3 = vector.load %arg7[%c0, %c0_1] : memref<16x128xf32, #tpu.memory_space<vmem>>, vector<16x128xf32>
    %c0_2 = arith.constant 0 : index
    %c0_3 = arith.constant 0 : index
    %4 = vector.load %arg3[%c0_2, %c0_3] : memref<16x32xf32, #tpu.memory_space<vmem>>, vector<16x32xf32>
    %5 = arith.truncf %4 : vector<16x32xf32> to vector<16x32xbf16>
    %c0_4 = arith.constant 0 : index
    %c0_5 = arith.constant 0 : index
    %6 = vector.load %arg4[%c0_4, %c0_5] : memref<32x128xbf16, #tpu.memory_space<vmem>>, vector<32x128xbf16>
    %cst = arith.constant dense<0.000000e+00> : vector<16x128xf32>
    %7 = tpu.matmul %5, %6, %cst {dimension_numbers = #tpu.dot_dimension_numbers<[1], [0], [0], [1], [0, 0, 1, 1], [], []>} : vector<16x32xbf16>, vector<32x128xbf16>, vector<16x128xf32> -> vector<16x128xf32>
    %8 = arith.addf %3, %7 : vector<16x128xf32>
    %c0_6 = arith.constant 0 : index
    %c0_7 = arith.constant 0 : index
    %9 = vector.load %arg7[%c0_6, %c0_7] : memref<16x128xf32, #tpu.memory_space<vmem>>, vector<16x128xf32>
    tpu.vector_store %arg7[%c0_6, %c0_7], %8 {strides = array<i32>} : memref<16x128xf32, #tpu.memory_space<vmem>>, vector<16x128xf32>,
    %c0_i32_8 = arith.constant 0 : i32
    %10 = arith.cmpi eq, %arg2, %c0_i32_8 : i32
    %11 = arith.extui %10 : i1 to i32
    %c0_i32_9 = arith.constant 0 : i32
    %12 = arith.cmpi ne, %11, %c0_i32_9 : i32
    scf.if %12 {
      %c0_10 = arith.constant 0 : index
      %c0_11 = arith.constant 0 : index
      %13 = vector.load %arg7[%c0_10, %c0_11] : memref<16x128xf32, #tpu.memory_space<vmem>>, vector<16x128xf32>
      %c0_12 = arith.constant 0 : index
      %c0_13 = arith.constant 0 : index
      %14 = vector.load %arg5[%c0_12, %c0_13] : memref<1x128xf32, #tpu.memory_space<vmem>>, vector<1x128xf32>
      %15 = vector.broadcast %14 : vector<1x128xf32> to vector<16x128xf32>
      %16 = arith.addf %13, %15 : vector<16x128xf32>
      %c0_14 = arith.constant 0 : index
      %c0_15 = arith.constant 0 : index
      %17 = vector.load %arg6[%c0_14, %c0_15] : memref<16x128xf32, #tpu.memory_space<vmem>>, vector<16x128xf32>
      tpu.vector_store %arg6[%c0_14, %c0_15], %16 {strides = array<i32>} : memref<16x128xf32, #tpu.memory_space<vmem>>, vector<16x128xf32>,
    } else {
    }
    return
  }
  func.func @transform_0(%arg0: i32, %arg1: i32, %arg2: i32) -> (i32, i32) {
    %c0_i32 = arith.constant 0 : i32
    return %arg0, %arg2 : i32, i32
  }
  func.func @transform_1(%arg0: i32, %arg1: i32, %arg2: i32) -> (i32, i32) {
    %c0_i32 = arith.constant 0 : i32
    return %arg2, %arg1 : i32, i32
  }
  func.func @transform_2(%arg0: i32, %arg1: i32, %arg2: i32) -> (i32, i32) {
    %c0_i32 = arith.constant 0 : i32
    %c0_i32_0 = arith.constant 0 : i32
    return %c0_i32, %arg1 : i32, i32
  }
  func.func @transform_3(%arg0: i32, %arg1: i32, %arg2: i32) -> (i32, i32) {
    %c0_i32 = arith.constant 0 : i32
    return %arg0, %arg1 : i32, i32
  }
}

</mosaic_0001>

<llo_original>
// kernel: tpu_custom_call.1
$region0: #{tpu_custom_call.1}
  #allocation0 [shape = 'u32[]', space=smem, size = 0x4, offset = 0x4, fixed_abs, tag = 'smem constant byte address 0x4 - core index']
  #allocation1 [shape = 'u32[144,128]{1,0:T(1,128)}', space=vmem, size = 0x12000, scoped, tag = 'internal scratch']
  #allocation2 [shape = 'f32[16,128]{1,0:T(8,128)}', space=vmem, size = 0x2000, scoped, tag = 'scratch operand']
  %s0 = inlined_call_operand.hbm [shape: f32[16,32], index: 0, kind: input, shape index: {}]
  %s1 = inlined_call_operand.hbm [shape: bf16[32,128], index: 1, kind: input, shape index: {}]
  %s2 = inlined_call_operand.vmem [shape: f32[1,128], index: 2, kind: input, shape index: {}]
  %s3 = inlined_call_operand.hbm [shape: f32[16,128], index: 3, kind: output, shape index: {}]
  %s4 = sld [smem:[#allocation0]]
  $region38: #{tpu_custom_call.1} parent=0
    _
  %s6 = ssub.s32 1, %s4
  %s7 = scalar_select 0, %s6, %s4
  $region1: #{tpu_custom_call.1} parent=0
    #allocation3 [shape = 'u8[8192]{0}', space=vmem, size = 0x2000, scoped, tag = 'input window, operand 0, single buffered']
    #allocation4 [shape = 's32[1]{0}', space=sflag, size = 0x4, scoped, tag = 'scoped memory for tpu_custom_call.1']
    #allocation5 [shape = 's32[1]{0}', space=sflag, size = 0x4, scoped, tag = 'scoped memory for tpu_custom_call.1']
    #allocation6 [shape = 'u8[8192]{0}', space=vmem, size = 0x2000, scoped, tag = 'input window, operand 1, single buffered']
    #allocation7 [shape = 's32[1]{0}', space=sflag, size = 0x4, scoped, tag = 'scoped memory for tpu_custom_call.1']
    #allocation8 [shape = 'u8[8192]{0}', space=vmem, size = 0x2000, scoped, tag = 'output window, operand 0, single buffered']
    %8 = vsyncpa [#allocation4], 0
    %9 = vsyncpa [#allocation7], 0
    %10 = vsyncpa [#allocation5], 0
    // Predicated region
    $region2: #{tpu_custom_call.1} parent=1 // pred_check
      _
    $region3: #{tpu_custom_call.1} parent=1 // pred_check_branch
      %12 = sbr.rel (0) target = $region5
    $region4: #{tpu_custom_call.1} parent=1 // pred_region
      %s14 = ssub.s32 256, 256
      %15 = vsyncadd [#allocation4], %s14
      %s16 = sshll.u32 [#allocation3], 4
      %s17 = int_to_ptr.vmem [resolvable:$true] %s16
      %22 = dma.hbm_to_vmem [thread:$0]  %s0, 256, %s17, [#allocation4], 128, 128, 8
    $region5: #{tpu_custom_call.1} parent=1 // pred_fallthru
      _
    // Predicated region
    $region6: #{tpu_custom_call.1} parent=1 // pred_check
      _
    $region7: #{tpu_custom_call.1} parent=1 // pred_check_branch
      %24 = sbr.rel (0) target = $region9
    $region8: #{tpu_custom_call.1} parent=1 // pred_region
      %s26 = ssub.s32 256, 256
      %27 = vsyncadd [#allocation7], %s26
      %s28 = sshll.u32 [#allocation6], 4
      %s29 = int_to_ptr.vmem [resolvable:$true] %s28
      %34 = dma.hbm_to_vmem [thread:$0]  %s1, 256, %s29, [#allocation7], 64, 64, 4
    $region9: #{tpu_custom_call.1} parent=1 // pred_fallthru
      _
    // Predicated region
    $region10: #{tpu_custom_call.1} parent=1 // pred_check
      _
    $region11: #{tpu_custom_call.1} parent=1 // pred_check_branch
      %36 = sbr.rel (0) target = $region13
    $region12: #{tpu_custom_call.1} parent=1 // pred_region
      _
    $region13: #{tpu_custom_call.1} parent=1 // pred_fallthru
      _
    // Predicated region
    $region14: #{tpu_custom_call.1} parent=1 // pred_check
      _
    $region15: #{tpu_custom_call.1} parent=1 // pred_check_branch
      %38 = sbr.rel (0) target = $region17
    $region16: #{tpu_custom_call.1} parent=1 // pred_region
      %39 = dma.done [#allocation4], 256
    $region17: #{tpu_custom_call.1} parent=1 // pred_fallthru
      _
    // Predicated region
    $region18: #{tpu_custom_call.1} parent=1 // pred_check
      _
    $region19: #{tpu_custom_call.1} parent=1 // pred_check_branch
      %41 = sbr.rel (0) target = $region21
    $region20: #{tpu_custom_call.1} parent=1 // pred_region
      %42 = dma.done [#allocation7], 256
    $region21: #{tpu_custom_call.1} parent=1 // pred_fallthru
      _
    %p44 = scmp.eq.s32.totalorder 0, 0
    // Predicated region
    $region22: #{tpu_custom_call.1} parent=1 // pred_check
      %p45 = pneg %p44
    $region23: #{tpu_custom_call.1} parent=1 // pred_check_branch
      %47 = sbr.rel (%p45) target = $region25
    $region24: #{tpu_custom_call.1} parent=1 // pred_region
      %48 = vst [vmem:[#allocation2] sm:$0xff] 0.0
      %49 = vst [vmem:[#allocation2 + $0x8] sm:$0xff] 0.0
    $region25: #{tpu_custom_call.1} parent=1 // pred_fallthru
      _
    %v50 = vld [vmem:[#allocation2] sm:$0xff]
    %v51 = vld [vmem:[#allocation2 + $0x8] sm:$0xff]
    %v52 = vld [vmem:[#allocation3] sm:$0xff]
    %v53 = vld [vmem:[#allocation3 + $0x8] sm:$0xff]
    %v54 = vpack.c.bf16 %v53, %v52
    %v55 = vld [vmem:[#allocation6] sm:$0xf]
    %v56 = vld [vmem:[#allocation6 + $0x4] sm:$0xf]
    %v57 = vld [vmem:[#allocation6 + $0x8] sm:$0xf]
    %v58 = vld [vmem:[#allocation6 + $0xc] sm:$0xf]
    %v63 = vunpack.c.l.b16 %v55
    %v64 = vunpack.c.l.b16 %v56
    %v65 = vunpack.c.l.b16 %v57
    %v66 = vunpack.c.l.b16 %v58
    %v67 = vpack.c.b16 %v64, %v63
    %v68 = vpack.c.b16 %v66, %v65
    %vm71 = vcmask 261120
    %v73 = vsel %vm71, %v54, 0
    %75 = vmatprep.subr.bf16.mxu0 0
    %76 = vmatpush1.bf16.msra.mxu0 %v67
    %77 = vmatprep.subr.bf16.mxu0 0
    %78 = vmatpush1.bf16.msra.mxu0 %v68
    %79 = vmatprep.subr.bf16.mxu0 0
    %80 = vmatpush1.bf16.msra.mxu0 0
    %81 = vmatprep.subr.bf16.mxu0 0
    %82 = vmatpush1.bf16.msra.mxu0 0
    %83 = vmatprep.subr.bf16.mxu0 0
    %84 = vmatpush1.bf16.msra.mxu0 0
    %85 = vmatprep.subr.bf16.mxu0 0
    %86 = vmatpush1.bf16.msra.mxu0 0
    %87 = vmatprep.subr.bf16.mxu0 0
    %88 = vmatpush1.bf16.msra.mxu0 0
    %89 = vmatprep.subr.bf16.mxu0 0
    %90 = vmatpush1.bf16.msra.mxu0 0
    %91 = vmatprep.subr.bf16.mxu0 0
    %92 = vmatpush1.bf16.msra.mxu0 0
    %93 = vmatprep.subr.bf16.mxu0 0
    %94 = vmatpush1.bf16.msra.mxu0 0
    %95 = vmatprep.subr.bf16.mxu0 0
    %96 = vmatpush1.bf16.msra.mxu0 0
    %97 = vmatprep.subr.bf16.mxu0 0
    %98 = vmatpush1.bf16.msra.mxu0 0
    %99 = vmatprep.subr.bf16.mxu0 0
    %100 = vmatpush1.bf16.msra.mxu0 0
    %101 = vmatprep.subr.bf16.mxu0 0
    %102 = vmatpush1.bf16.msra.mxu0 0
    %103 = vmatprep.subr.bf16.mxu0 0
    %104 = vmatpush1.bf16.msra.mxu0 0
    %105 = vmatprep.subr.bf16.mxu0 0
    %106 = vmatpush1.bf16.msra.mxu0 0
    %107 = vmatprep.mubr.bf16.mxu0 0
    %108 = vmatmul.mubr.bf16.gmra.mrb[0].mxu0 %v73
    %v109 = vpop.f32.mrb[0].mxu0
    %v110 = vadd.f32 0.0, %v109
    %v111 = vpop.f32.mrb[0].mxu0
    %v112 = vpop.f32.mrb[0].mxu0
    %v113 = vadd.f32 0.0, %v112
    %v114 = vpop.f32.mrb[0].mxu0
    %115 = vdwg.mxu0
    %v116 = vadd.f32 %v50, %v110
    %v117 = vadd.f32 %v51, %v113
    %118 = vst [vmem:[#allocation2] sm:$0xff] %v116
    %119 = vst [vmem:[#allocation2 + $0x8] sm:$0xff] %v117
    // Predicated region
    $region26: #{tpu_custom_call.1} parent=1 // pred_check
      %p120 = pneg %p44
    $region27: #{tpu_custom_call.1} parent=1 // pred_check_branch
      %122 = sbr.rel (%p120) target = $region29
    $region28: #{tpu_custom_call.1} parent=1 // pred_region
      %v123 = vld [vmem:[#allocation2] sm:$0xff]
      %v124 = vld [vmem:[#allocation2 + $0x8] sm:$0xff]
      %v125 = vld [vmem:[%s2] sm:$0x1]
      %v127 = vlaneseq
      %v128 = vshrl.u32 %v127, 7
      %v129 = vsub.s32 0, %v128
      %v130 = vrot.slane %v125, %v129
      %v132 = vadd.f32 %v123, %v130
      %v133 = vadd.f32 %v124, %v130
      %134 = vst [vmem:[#allocation8] sm:$0xff] %v132
      %135 = vst [vmem:[#allocation8 + $0x8] sm:$0xff] %v133
    $region29: #{tpu_custom_call.1} parent=1 // pred_fallthru
      _
    // Predicated region
    $region30: #{tpu_custom_call.1} parent=1 // pred_check
      _
    $region31: #{tpu_custom_call.1} parent=1 // pred_check_branch
      %137 = sbr.rel (0) target = $region33
    $region32: #{tpu_custom_call.1} parent=1 // pred_region
      %s139 = ssub.s32 256, 256
      %140 = vsyncadd [#allocation5], %s139
      %s141 = sshll.u32 [#allocation8], 4
      %s142 = int_to_ptr.vmem [resolvable:$true] %s141
      %147 = dma.vmem_to_hbm [thread:$0]  %s142, 256, %s3, [#allocation5], 128, 128, 8
    $region33: #{tpu_custom_call.1} parent=1 // pred_fallthru
      _
    // Predicated region
    $region34: #{tpu_custom_call.1} parent=1 // pred_check
      _
    $region35: #{tpu_custom_call.1} parent=1 // pred_check_branch
      %149 = sbr.rel (0) target = $region37
    $region36: #{tpu_custom_call.1} parent=1 // pred_region
      %150 = dma.done [#allocation5], 256
    $region37: #{tpu_custom_call.1} parent=1 // pred_fallthru
      _
    %151 = vsyncpa [#allocation4], 1
    %152 = vsyncpa [#allocation7], 1
    %153 = vsyncpa [#allocation5], 1

</llo_original>
